<compile_context>
chip_gen: v5e
topology: v5e:2x2
jax: 0.10.0
libtpu: 0.0.40
codegen_flags: <defaults>
</compile_context>

<pallas_src>
import functools

import jax
import jax.numpy as jnp
from jax.experimental import pallas as pl
from jax.experimental.pallas import tpu as pltpu

NUM_CLASSES = 10
IN_FEATURES = 784          # 1 * 28 * 28  (full-K block: legal, equals array dim)
N_PAD = 128                # lane-dense output width


def _linear_kernel(x_ref, w_ref, b_ref, o_ref):
    # x_ref: (TB, 784) f32, w_ref: (784, N_PAD) bf16,
    # b_ref: (1, N_PAD) f32,  o_ref: (TB, N_PAD) f32
    x_bf16 = x_ref[...].astype(jnp.bfloat16)      # in-kernel cast, hidden under DMA
    acc = jnp.dot(x_bf16, w_ref[...], preferred_element_type=jnp.float32)
    o_ref[...] = acc + b_ref[...]


def _round_up(x, m):
    return (x + m - 1) // m * m


def _cdiv(a, b):
    return (a + b - 1) // b


def prepare_params(weight, bias, compute_dtype=jnp.bfloat16):
    """One-time parameter prep (outside the per-call hot path).

    weight: (10, 784) PyTorch layout; bias: (10,).
    Returns (w_pad: (784, 128) compute_dtype, b_pad: (1, 128) float32).
    """
    w_t = weight.astype(jnp.float32).T                         # (784, 10)
    w_pad = jnp.zeros((IN_FEATURES, N_PAD), jnp.float32)
    w_pad = w_pad.at[:, :NUM_CLASSES].set(w_t)
    b_pad = jnp.zeros((1, N_PAD), jnp.float32)
    b_pad = b_pad.at[0, :NUM_CLASSES].set(bias.astype(jnp.float32))
    return w_pad.astype(compute_dtype), b_pad


@functools.partial(jax.jit, static_argnames=("block_b",))
def mnist_net_forward(x_nchw, w_pad, b_pad, *, block_b=2048):
    """x_nchw: (B, 1, 28, 28) f32; w_pad/b_pad from prepare_params. Returns (B, 10) f32."""
    B = x_nchw.shape[0]

    # Flatten is a free view; NO dtype cast / K-pad pass over HBM here.
    x = x_nchw.reshape(B, IN_FEATURES)

    # Adaptive tile size: caps batch padding at <16 rows, keeps rows a
    # multiple of 16 (bf16 sublane packing for the MXU operand).
    n_tiles = max(1, _cdiv(B, block_b))
    if B >= 512:
        # Ensure an even number of >=2 grid steps so v7x's two TensorCores
        # both get work under dimension_semantics=("parallel",).
        n_tiles = max(n_tiles, 2)
        n_tiles += n_tiles % 2
    tb = _round_up(_cdiv(B, n_tiles), 16)
    rows = _round_up(B, tb)
    if rows != B:
        x = jnp.pad(x, ((0, rows - B), (0, 0)))   # only the few remainder rows

    out = pl.pallas_call(
        _linear_kernel,
        out_shape=jax.ShapeDtypeStruct((rows, N_PAD), jnp.float32),
        grid_spec=pltpu.PrefetchScalarGridSpec(
            num_scalar_prefetch=0,
            grid=(rows // tb,),
            in_specs=[
                pl.BlockSpec((tb, IN_FEATURES), lambda i: (i, 0)),      # x tile (f32)
                pl.BlockSpec((IN_FEATURES, N_PAD), lambda i: (0, 0)),   # weight (resident)
                pl.BlockSpec((1, N_PAD), lambda i: (0, 0)),             # bias (resident)
            ],
            out_specs=pl.BlockSpec((tb, N_PAD), lambda i: (i, 0)),
        ),
        compiler_params=pltpu.CompilerParams(
            dimension_semantics=("parallel",),   # batch tiles independent -> megacore
            vmem_limit_bytes=32 << 20,           # plenty for ~16 MiB double-buffered footprint
        ),
    )(x, w_pad, b_pad)

    return out[:B, :NUM_CLASSES]


if __name__ == "__main__":
    key = jax.random.PRNGKey(0)
    kx, kw, kb = jax.random.split(key, 3)

    batch = 2
    # MNIST-shaped input: (B, 1, 28, 28) NCHW, matching the PyTorch module.
    x = jax.random.normal(kx, (batch, 1, 28, 28), dtype=jnp.float32)

    # Deterministic Linear(784, 10) params, PyTorch-style uniform init.
    bound = 1.0 / (IN_FEATURES ** 0.5)
    weight = jax.random.uniform(kw, (NUM_CLASSES, IN_FEATURES),
                                minval=-bound, maxval=bound, dtype=jnp.float32)
    bias = jax.random.uniform(kb, (NUM_CLASSES,),
                              minval=-bound, maxval=bound, dtype=jnp.float32)

    # One-time parameter preparation (transpose + column-pad + bf16 cast).
    w_pad, b_pad = prepare_params(weight, bias)

    out = mnist_net_forward(x, w_pad, b_pad)
    out = jax.block_until_ready(out)
    assert out.shape == (batch, NUM_CLASSES)

    # Reference checks.
    ref_f32 = x.reshape(batch, -1) @ weight.T + bias
    # Emulate the in-kernel bf16 input/weight cast for a tight comparison.
    ref_bf16 = (x.reshape(batch, -1).astype(jnp.bfloat16).astype(jnp.float32)
                @ weight.T.astype(jnp.bfloat16).astype(jnp.float32)) + bias
    assert jnp.allclose(out, ref_bf16, atol=2e-3, rtol=2e-3)
    assert jnp.allclose(out, ref_f32, atol=3e-2, rtol=3e-2)

    print("KERNEL_OK")
</pallas_src>

<mosaic_0001>
module attributes {stable_mosaic.version = 11 : i64} {
  func.func @_linear_kernel(%arg0: i32, %arg1: memref<16x784xf32, #tpu.memory_space<vmem>>, %arg2: memref<784x128xbf16, #tpu.memory_space<vmem>>, %arg3: memref<1x128xf32, #tpu.memory_space<vmem>>, %arg4: memref<16x128xf32, #tpu.memory_space<vmem>>) attributes {dimension_semantics = [#tpu.dimension_semantics<parallel>], iteration_bounds = array<i64: 1>, scalar_prefetch = 0 : i64, scratch_operands = 0 : i64, tpu.core_type = #tpu.core_type<tc>, window_params = [{transform_indices = @transform_0, window_bounds = array<i64: 16, 784>}, {pipeline_mode = #tpu.pipeline_mode<synchronous>, transform_indices = @transform_1, window_bounds = array<i64: 784, 128>}, {pipeline_mode = #tpu.pipeline_mode<synchronous>, transform_indices = @transform_2, window_bounds = array<i64: 1, 128>}, {transform_indices = @transform_3, window_bounds = array<i64: 16, 128>}]} {
    %c0 = arith.constant 0 : index
    %c0_0 = arith.constant 0 : index
    %0 = vector.load %arg1[%c0, %c0_0] : memref<16x784xf32, #tpu.memory_space<vmem>>, vector<16x784xf32>
    %1 = arith.truncf %0 : vector<16x784xf32> to vector<16x784xbf16>
    %c0_1 = arith.constant 0 : index
    %c0_2 = arith.constant 0 : index
    %2 = vector.load %arg2[%c0_1, %c0_2] : memref<784x128xbf16, #tpu.memory_space<vmem>>, vector<784x128xbf16>
    %cst = arith.constant dense<0.000000e+00> : vector<16x128xf32>
    %3 = tpu.matmul %1, %2, %cst {dimension_numbers = #tpu.dot_dimension_numbers<[1], [0], [0], [1], [0, 0, 1, 1], [], []>} : vector<16x784xbf16>, vector<784x128xbf16>, vector<16x128xf32> -> vector<16x128xf32>
    %c0_3 = arith.constant 0 : index
    %c0_4 = arith.constant 0 : index
    %4 = vector.load %arg3[%c0_3, %c0_4] : memref<1x128xf32, #tpu.memory_space<vmem>>, vector<1x128xf32>
    %5 = vector.broadcast %4 : vector<1x128xf32> to vector<16x128xf32>
    %6 = arith.addf %3, %5 : vector<16x128xf32>
    %c0_5 = arith.constant 0 : index
    %c0_6 = arith.constant 0 : index
    %7 = vector.load %arg4[%c0_5, %c0_6] : memref<16x128xf32, #tpu.memory_space<vmem>>, vector<16x128xf32>
    tpu.vector_store %arg4[%c0_5, %c0_6], %6 {strides = array<i32>} : memref<16x128xf32, #tpu.memory_space<vmem>>, vector<16x128xf32>,
    return
  }
  func.func @transform_0(%arg0: i32) -> (i32, i32) {
    %c0_i32 = arith.constant 0 : i32
    %c0_i32_0 = arith.constant 0 : i32
    return %arg0, %c0_i32 : i32, i32
  }
  func.func @transform_1(%arg0: i32) -> (i32, i32) {
    %c0_i32 = arith.constant 0 : i32
    %c0_i32_0 = arith.constant 0 : i32
    %c0_i32_1 = arith.constant 0 : i32
    return %c0_i32, %c0_i32_0 : i32, i32
  }
  func.func @transform_2(%arg0: i32) -> (i32, i32) {
    %c0_i32 = arith.constant 0 : i32
    %c0_i32_0 = arith.constant 0 : i32
    %c0_i32_1 = arith.constant 0 : i32
    return %c0_i32, %c0_i32_0 : i32, i32
  }
  func.func @transform_3(%arg0: i32) -> (i32, i32) {
    %c0_i32 = arith.constant 0 : i32
    %c0_i32_0 = arith.constant 0 : i32
    return %arg0, %c0_i32 : i32, i32
  }
}

</mosaic_0001>

<llo_original>
// kernel: mnist_net_forward.1
$region0: #{mnist_net_forward.1}
  #allocation0 [shape = 'u32[]', space=smem, size = 0x4, offset = 0x4, fixed_abs, tag = 'smem constant byte address 0x4 - core index']
  #allocation1 [shape = 'u32[72,128]{1,0:T(1,128)}', space=vmem, size = 0x9000, scoped, tag = 'internal scratch']
  %s0 = inlined_call_operand.vmem [shape: f32[16,784], index: 0, kind: input, shape index: {}]
  %s1 = inlined_call_operand.hbm [shape: bf16[784,128], index: 1, kind: input, shape index: {}]
  %s2 = inlined_call_operand.vmem [shape: f32[1,128], index: 2, kind: input, shape index: {}]
  %s3 = inlined_call_operand.vmem [shape: f32[16,128], index: 3, kind: output, shape index: {}]
  %s4 = sld [smem:[#allocation0]]
  $region26: #{mnist_net_forward.1} parent=0
    _
  %s6 = ssub.s32 1, %s4
  %s7 = scalar_select 0, %s6, %s4
  $region1: #{mnist_net_forward.1} parent=0
    #allocation2 [shape = 'u8[200704]{0}', space=vmem, size = 0x31000, scoped, tag = 'input window, operand 1, single buffered']
    #allocation3 [shape = 's32[1]{0}', space=sflag, size = 0x4, scoped, tag = 'scoped memory for mnist_net_forward.1']
    %8 = vsyncpa [#allocation3], 0
    // Predicated region
    $region2: #{mnist_net_forward.1} parent=1 // pred_check
      _
    $region3: #{mnist_net_forward.1} parent=1 // pred_check_branch
      %10 = sbr.rel (0) target = $region5
    $region4: #{mnist_net_forward.1} parent=1 // pred_region
      _
    $region5: #{mnist_net_forward.1} parent=1 // pred_fallthru
      _
    // Predicated region
    $region6: #{mnist_net_forward.1} parent=1 // pred_check
      _
    $region7: #{mnist_net_forward.1} parent=1 // pred_check_branch
      %12 = sbr.rel (0) target = $region9
    $region8: #{mnist_net_forward.1} parent=1 // pred_region
      %14 = vsyncadd [#allocation3], 0
      %s15 = sshll.u32 %s1, 4
      %s16 = int_to_ptr.hbm [resolvable:$true] %s15
      %s17 = sshll.u32 [#allocation2], 4
      %s18 = int_to_ptr.vmem [resolvable:$true] %s17
      %23 = dma.hbm_to_vmem [thread:$0]  %s16, 6272, %s18, [#allocation3], 64, 64, 4
    $region9: #{mnist_net_forward.1} parent=1 // pred_fallthru
      _
    // Predicated region
    $region10: #{mnist_net_forward.1} parent=1 // pred_check
      _
    $region11: #{mnist_net_forward.1} parent=1 // pred_check_branch
      %25 = sbr.rel (0) target = $region13
    $region12: #{mnist_net_forward.1} parent=1 // pred_region
      _
    $region13: #{mnist_net_forward.1} parent=1 // pred_fallthru
      _
    // Predicated region
    $region14: #{mnist_net_forward.1} parent=1 // pred_check
      _
    $region15: #{mnist_net_forward.1} parent=1 // pred_check_branch
      %27 = sbr.rel (0) target = $region17
    $region16: #{mnist_net_forward.1} parent=1 // pred_region
      %29 = dma.done [#allocation3], 6272
    $region17: #{mnist_net_forward.1} parent=1 // pred_fallthru
      _
    %v31 = vld [vmem:[%s0] sm:$0xff]
    %v32 = vld [vmem:[%s0 + $0x8] sm:$0xff]
    %v33 = vld [vmem:[%s0 + $0x10] sm:$0xff]
    %v34 = vld [vmem:[%s0 + $0x18] sm:$0xff]
    %v35 = vld [vmem:[%s0 + $0x20] sm:$0xff]
    %v36 = vld [vmem:[%s0 + $0x28] sm:$0xff]
    %v37 = vld [vmem:[%s0 + $0x30] sm:$0xff]
    %v38 = vld [vmem:[%s0 + $0x38] sm:$0xff]
    %v39 = vld [vmem:[%s0 + $0x40] sm:$0xff]
    %v40 = vld [vmem:[%s0 + $0x48] sm:$0xff]
    %v41 = vld [vmem:[%s0 + $0x50] sm:$0xff]
    %v42 = vld [vmem:[%s0 + $0x58] sm:$0xff]
    %v43 = vld [vmem:[%s0 + $0x60] sm:$0xff]
    %v44 = vld [vmem:[%s0 + $0x68] sm:$0xff]
    %v45 = vpack.c.bf16 %v38, %v31
    %v46 = vpack.c.bf16 %v39, %v32
    %v47 = vpack.c.bf16 %v40, %v33
    %v48 = vpack.c.bf16 %v41, %v34
    %v49 = vpack.c.bf16 %v42, %v35
    %v50 = vpack.c.bf16 %v43, %v36
    %v51 = vpack.c.bf16 %v44, %v37
    %v52 = vld [vmem:[#allocation2] sm:$0xf]
    %v53 = vld [vmem:[#allocation2 + $0x4] sm:$0xf]
    %v54 = vld [vmem:[#allocation2 + $0x8] sm:$0xf]
    %v55 = vld [vmem:[#allocation2 + $0xc] sm:$0xf]
    %v56 = vld [vmem:[#allocation2 + $0x10] sm:$0xf]
    %v57 = vld [vmem:[#allocation2 + $0x14] sm:$0xf]
    %v58 = vld [vmem:[#allocation2 + $0x18] sm:$0xf]
    %v59 = vld [vmem:[#allocation2 + $0x1c] sm:$0xf]
    %v60 = vld [vmem:[#allocation2 + $0x20] sm:$0xf]
    %v61 = vld [vmem:[#allocation2 + $0x24] sm:$0xf]
    %v62 = vld [vmem:[#allocation2 + $0x28] sm:$0xf]
    %v63 = vld [vmem:[#allocation2 + $0x2c] sm:$0xf]
    %v64 = vld [vmem:[#allocation2 + $0x30] sm:$0xf]
    %v65 = vld [vmem:[#allocation2 + $0x34] sm:$0xf]
    %v66 = vld [vmem:[#allocation2 + $0x38] sm:$0xf]
    %v67 = vld [vmem:[#allocation2 + $0x3c] sm:$0xf]
    %v68 = vld [vmem:[#allocation2 + $0x40] sm:$0xf]
    %v69 = vld [vmem:[#allocation2 + $0x44] sm:$0xf]
    %v70 = vld [vmem:[#allocation2 + $0x48] sm:$0xf]
    %v71 = vld [vmem:[#allocation2 + $0x4c] sm:$0xf]
    %v72 = vld [vmem:[#allocation2 + $0x50] sm:$0xf]
    %v73 = vld [vmem:[#allocation2 + $0x54] sm:$0xf]
    %v74 = vld [vmem:[#allocation2 + $0x58] sm:$0xf]
    %v75 = vld [vmem:[#allocation2 + $0x5c] sm:$0xf]
    %v76 = vld [vmem:[#allocation2 + $0x60] sm:$0xf]
    %v77 = vld [vmem:[#allocation2 + $0x64] sm:$0xf]
    %v78 = vld [vmem:[#allocation2 + $0x68] sm:$0xf]
    %v79 = vld [vmem:[#allocation2 + $0x6c] sm:$0xf]
    %v80 = vld [vmem:[#allocation2 + $0x70] sm:$0xf]
    %v81 = vld [vmem:[#allocation2 + $0x74] sm:$0xf]
    %v82 = vld [vmem:[#allocation2 + $0x78] sm:$0xf]
    %v83 = vld [vmem:[#allocation2 + $0x7c] sm:$0xf]
    %v84 = vld [vmem:[#allocation2 + $0x80] sm:$0xf]
    %v85 = vld [vmem:[#allocation2 + $0x84] sm:$0xf]
    %v86 = vld [vmem:[#allocation2 + $0x88] sm:$0xf]
    %v87 = vld [vmem:[#allocation2 + $0x8c] sm:$0xf]
    %v88 = vld [vmem:[#allocation2 + $0x90] sm:$0xf]
    %v89 = vld [vmem:[#allocation2 + $0x94] sm:$0xf]
    %v90 = vld [vmem:[#allocation2 + $0x98] sm:$0xf]
    %v91 = vld [vmem:[#allocation2 + $0x9c] sm:$0xf]
    %v92 = vld [vmem:[#allocation2 + $0xa0] sm:$0xf]
    %v93 = vld [vmem:[#allocation2 + $0xa4] sm:$0xf]
    %v94 = vld [vmem:[#allocation2 + $0xa8] sm:$0xf]
    %v95 = vld [vmem:[#allocation2 + $0xac] sm:$0xf]
    %v96 = vld [vmem:[#allocation2 + $0xb0] sm:$0xf]
    %v97 = vld [vmem:[#allocation2 + $0xb4] sm:$0xf]
    %v98 = vld [vmem:[#allocation2 + $0xb8] sm:$0xf]
    %v99 = vld [vmem:[#allocation2 + $0xbc] sm:$0xf]
    %v100 = vld [vmem:[#allocation2 + $0xc0] sm:$0xf]
    %v101 = vld [vmem:[#allocation2 + $0xc4] sm:$0xf]
    %v102 = vld [vmem:[#allocation2 + $0xc8] sm:$0xf]
    %v103 = vld [vmem:[#allocation2 + $0xcc] sm:$0xf]
    %v104 = vld [vmem:[#allocation2 + $0xd0] sm:$0xf]
    %v105 = vld [vmem:[#allocation2 + $0xd4] sm:$0xf]
    %v106 = vld [vmem:[#allocation2 + $0xd8] sm:$0xf]
    %v107 = vld [vmem:[#allocation2 + $0xdc] sm:$0xf]
    %v108 = vld [vmem:[#allocation2 + $0xe0] sm:$0xf]
    %v109 = vld [vmem:[#allocation2 + $0xe4] sm:$0xf]
    %v110 = vld [vmem:[#allocation2 + $0xe8] sm:$0xf]
    %v111 = vld [vmem:[#allocation2 + $0xec] sm:$0xf]
    %v112 = vld [vmem:[#allocation2 + $0xf0] sm:$0xf]
    %v113 = vld [vmem:[#allocation2 + $0xf4] sm:$0xf]
    %v114 = vld [vmem:[#allocation2 + $0xf8] sm:$0xf]
    %v115 = vld [vmem:[#allocation2 + $0xfc] sm:$0xf]
    %v116 = vld [vmem:[#allocation2 + $0x100] sm:$0xf]
    %v117 = vld [vmem:[#allocation2 + $0x104] sm:$0xf]
    %v118 = vld [vmem:[#allocation2 + $0x108] sm:$0xf]
    %v119 = vld [vmem:[#allocation2 + $0x10c] sm:$0xf]
    %v120 = vld [vmem:[#allocation2 + $0x110] sm:$0xf]
    %v121 = vld [vmem:[#allocation2 + $0x114] sm:$0xf]
    %v122 = vld [vmem:[#allocation2 + $0x118] sm:$0xf]
    %v123 = vld [vmem:[#allocation2 + $0x11c] sm:$0xf]
    %v124 = vld [vmem:[#allocation2 + $0x120] sm:$0xf]
    %v125 = vld [vmem:[#allocation2 + $0x124] sm:$0xf]
    %v126 = vld [vmem:[#allocation2 + $0x128] sm:$0xf]
    %v127 = vld [vmem:[#allocation2 + $0x12c] sm:$0xf]
    %v128 = vld [vmem:[#allocation2 + $0x130] sm:$0xf]
    %v129 = vld [vmem:[#allocation2 + $0x134] sm:$0xf]
    %v130 = vld [vmem:[#allocation2 + $0x138] sm:$0xf]
    %v131 = vld [vmem:[#allocation2 + $0x13c] sm:$0xf]
    %v132 = vld [vmem:[#allocation2 + $0x140] sm:$0xf]
    %v133 = vld [vmem:[#allocation2 + $0x144] sm:$0xf]
    %v134 = vld [vmem:[#allocation2 + $0x148] sm:$0xf]
    %v135 = vld [vmem:[#allocation2 + $0x14c] sm:$0xf]
    %v136 = vld [vmem:[#allocation2 + $0x150] sm:$0xf]
    %v137 = vld [vmem:[#allocation2 + $0x154] sm:$0xf]
    %v138 = vld [vmem:[#allocation2 + $0x158] sm:$0xf]
    %v139 = vld [vmem:[#allocation2 + $0x15c] sm:$0xf]
    %v140 = vld [vmem:[#allocation2 + $0x160] sm:$0xf]
    %v141 = vld [vmem:[#allocation2 + $0x164] sm:$0xf]
    %v142 = vld [vmem:[#allocation2 + $0x168] sm:$0xf]
    %v143 = vld [vmem:[#allocation2 + $0x16c] sm:$0xf]
    %v144 = vld [vmem:[#allocation2 + $0x170] sm:$0xf]
    %v145 = vld [vmem:[#allocation2 + $0x174] sm:$0xf]
    %v146 = vld [vmem:[#allocation2 + $0x178] sm:$0xf]
    %v147 = vld [vmem:[#allocation2 + $0x17c] sm:$0xf]
    %v148 = vld [vmem:[#allocation2 + $0x180] sm:$0xf]
    %v149 = vld [vmem:[#allocation2 + $0x184] sm:$0xf]
    %v150 = vld [vmem:[%s2] sm:$0x1]
    %v152 = vperm.slane %v150, 0
    %v252 = vunpack.c.l.b16 %v52
    %v253 = vunpack.c.l.b16 %v53
    %v254 = vunpack.c.l.b16 %v54
    %v255 = vunpack.c.l.b16 %v55
    %v256 = vunpack.c.l.b16 %v56
    %v257 = vunpack.c.l.b16 %v57
    %v258 = vunpack.c.l.b16 %v58
    %v259 = vunpack.c.l.b16 %v59
    %v260 = vunpack.c.l.b16 %v60
    %v261 = vunpack.c.l.b16 %v61
    %v262 = vunpack.c.l.b16 %v62
    %v263 = vunpack.c.l.b16 %v63
    %v264 = vunpack.c.l.b16 %v64
    %v265 = vunpack.c.l.b16 %v65
    %v266 = vunpack.c.l.b16 %v66
    %v267 = vunpack.c.l.b16 %v67
    %v268 = vunpack.c.l.b16 %v68
    %v269 = vunpack.c.l.b16 %v69
    %v270 = vunpack.c.l.b16 %v70
    %v271 = vunpack.c.l.b16 %v71
    %v272 = vunpack.c.l.b16 %v72
    %v273 = vunpack.c.l.b16 %v73
    %v274 = vunpack.c.l.b16 %v74
    %v275 = vunpack.c.l.b16 %v75
    %v276 = vunpack.c.l.b16 %v76
    %v277 = vunpack.c.l.b16 %v77
    %v278 = vunpack.c.l.b16 %v78
    %v279 = vunpack.c.l.b16 %v79
    %v280 = vunpack.c.l.b16 %v80
    %v281 = vunpack.c.l.b16 %v81
    %v282 = vunpack.c.l.b16 %v82
    %v283 = vunpack.c.l.b16 %v83
    %v284 = vunpack.c.l.b16 %v84
    %v285 = vunpack.c.l.b16 %v85
    %v286 = vunpack.c.l.b16 %v86
    %v287 = vunpack.c.l.b16 %v87
    %v288 = vunpack.c.l.b16 %v88
    %v289 = vunpack.c.l.b16 %v89
    %v290 = vunpack.c.l.b16 %v90
    %v291 = vunpack.c.l.b16 %v91
    %v292 = vunpack.c.l.b16 %v92
    %v293 = vunpack.c.l.b16 %v93
    %v294 = vunpack.c.l.b16 %v94
    %v295 = vunpack.c.l.b16 %v95
    %v296 = vunpack.c.l.b16 %v96
    %v297 = vunpack.c.l.b16 %v97
    %v298 = vunpack.c.l.b16 %v98
    %v299 = vunpack.c.l.b16 %v99
    %v300 = vunpack.c.l.b16 %v100
    %v301 = vunpack.c.l.b16 %v101
    %v302 = vunpack.c.l.b16 %v102
    %v303 = vunpack.c.l.b16 %v103
    %v304 = vunpack.c.l.b16 %v104
    %v305 = vunpack.c.l.b16 %v105
    %v306 = vunpack.c.l.b16 %v106
    %v307 = vunpack.c.l.b16 %v107
    %v308 = vunpack.c.l.b16 %v108
    %v309 = vunpack.c.l.b16 %v109
    %v310 = vunpack.c.l.b16 %v110
    %v311 = vunpack.c.l.b16 %v111
    %v312 = vunpack.c.l.b16 %v112
    %v313 = vunpack.c.l.b16 %v113
    %v314 = vunpack.c.l.b16 %v114
    %v315 = vunpack.c.l.b16 %v115
    %v316 = vunpack.c.l.b16 %v116
    %v317 = vunpack.c.l.b16 %v117
    %v318 = vunpack.c.l.b16 %v118
    %v319 = vunpack.c.l.b16 %v119
    %v320 = vunpack.c.l.b16 %v120
    %v321 = vunpack.c.l.b16 %v121
    %v322 = vunpack.c.l.b16 %v122
    %v323 = vunpack.c.l.b16 %v123
    %v324 = vunpack.c.l.b16 %v124
    %v325 = vunpack.c.l.b16 %v125
    %v326 = vunpack.c.l.b16 %v126
    %v327 = vunpack.c.l.b16 %v127
    %v328 = vunpack.c.l.b16 %v128
    %v329 = vunpack.c.l.b16 %v129
    %v330 = vunpack.c.l.b16 %v130
    %v331 = vunpack.c.l.b16 %v131
    %v332 = vunpack.c.l.b16 %v132
    %v333 = vunpack.c.l.b16 %v133
    %v334 = vunpack.c.l.b16 %v134
    %v335 = vunpack.c.l.b16 %v135
    %v336 = vunpack.c.l.b16 %v136
    %v337 = vunpack.c.l.b16 %v137
    %v338 = vunpack.c.l.b16 %v138
    %v339 = vunpack.c.l.b16 %v139
    %v340 = vunpack.c.l.b16 %v140
    %v341 = vunpack.c.l.b16 %v141
    %v342 = vunpack.c.l.b16 %v142
    %v343 = vunpack.c.l.b16 %v143
    %v344 = vunpack.c.l.b16 %v144
    %v345 = vunpack.c.l.b16 %v145
    %v346 = vunpack.c.l.b16 %v146
    %v347 = vunpack.c.l.b16 %v147
    %v348 = vunpack.c.l.b16 %v148
    %v349 = vunpack.c.l.b16 %v149
    %v350 = vpack.c.b16 %v253, %v252
    %v351 = vpack.c.b16 %v255, %v254
    %v352 = vpack.c.b16 %v257, %v256
    %v353 = vpack.c.b16 %v259, %v258
    %v354 = vpack.c.b16 %v261, %v260
    %v355 = vpack.c.b16 %v263, %v262
    %v356 = vpack.c.b16 %v265, %v264
    %v357 = vpack.c.b16 %v267, %v266
    %v358 = vpack.c.b16 %v269, %v268
    %v359 = vpack.c.b16 %v271, %v270
    %v360 = vpack.c.b16 %v273, %v272
    %v361 = vpack.c.b16 %v275, %v274
    %v362 = vpack.c.b16 %v277, %v276
    %v363 = vpack.c.b16 %v279, %v278
    %v364 = vpack.c.b16 %v281, %v280
    %v365 = vpack.c.b16 %v283, %v282
    %v366 = vpack.c.b16 %v285, %v284
    %v367 = vpack.c.b16 %v287, %v286
    %v368 = vpack.c.b16 %v289, %v288
    %v369 = vpack.c.b16 %v291, %v290
    %v370 = vpack.c.b16 %v293, %v292
    %v371 = vpack.c.b16 %v295, %v294
    %v372 = vpack.c.b16 %v297, %v296
    %v373 = vpack.c.b16 %v299, %v298
    %v374 = vpack.c.b16 %v301, %v300
    %v375 = vpack.c.b16 %v303, %v302
    %v376 = vpack.c.b16 %v305, %v304
    %v377 = vpack.c.b16 %v307, %v306
    %v378 = vpack.c.b16 %v309, %v308
    %v379 = vpack.c.b16 %v311, %v310
    %v380 = vpack.c.b16 %v313, %v312
    %v381 = vpack.c.b16 %v315, %v314
    %v382 = vpack.c.b16 %v317, %v316
    %v383 = vpack.c.b16 %v319, %v318
    %v384 = vpack.c.b16 %v321, %v320
    %v385 = vpack.c.b16 %v323, %v322
    %v386 = vpack.c.b16 %v325, %v324
    %v387 = vpack.c.b16 %v327, %v326
    %v388 = vpack.c.b16 %v329, %v328
    %v389 = vpack.c.b16 %v331, %v330
    %v390 = vpack.c.b16 %v333, %v332
    %v391 = vpack.c.b16 %v335, %v334
    %v392 = vpack.c.b16 %v337, %v336
    %v393 = vpack.c.b16 %v339, %v338
    %v394 = vpack.c.b16 %v341, %v340
    %v395 = vpack.c.b16 %v343, %v342
    %v396 = vpack.c.b16 %v345, %v344
    %v397 = vpack.c.b16 %v347, %v346
    %v398 = vpack.c.b16 %v349, %v348
    %vm448 = vcmask 130048
    %v450 = vsel %vm448, %v51, 0
    %452 = vmatpush.bf16.msra.mxu0 %v357
    %453 = vmatpush.bf16.msra.mxu0 %v356
    %454 = vmatpush.bf16.msra.mxu0 %v355
    %455 = vmatpush.bf16.msra.mxu0 %v354
    %456 = vmatpush.bf16.msra.mxu0 %v353
    %457 = vmatpush.bf16.msra.mxu0 %v352
    %458 = vmatpush.bf16.msra.mxu0 %v351
    %459 = vmatpush.bf16.msra.mxu0 %v350
    %460 = vmatmul.bf16.gmra.mxu0 %v45
    %v461 = vpop.f32.mrf.mxu0
    %v462 = vadd.f32 %v152, %v461
    %v463 = vpop.f32.mrf.mxu0
    %v464 = vadd.f32 %v152, %v463
    %465 = vdwg.mxu0
    %466 = vmatpush.bf16.msra.mxu0 %v365
    %467 = vmatpush.bf16.msra.mxu0 %v364
    %468 = vmatpush.bf16.msra.mxu0 %v363
    %469 = vmatpush.bf16.msra.mxu0 %v362
    %470 = vmatpush.bf16.msra.mxu0 %v361
    %471 = vmatpush.bf16.msra.mxu0 %v360
    %472 = vmatpush.bf16.msra.mxu0 %v359
    %473 = vmatpush.bf16.msra.mxu0 %v358
    %474 = vmatmul.bf16.gmra.mxu0 %v46
    %v475 = vpop.f32.mrf.mxu0
    %v476 = vadd.f32 %v462, %v475
    %v477 = vpop.f32.mrf.mxu0
    %v478 = vadd.f32 %v464, %v477
    %479 = vdwg.mxu0
    %480 = vmatpush.bf16.msra.mxu0 %v373
    %481 = vmatpush.bf16.msra.mxu0 %v372
    %482 = vmatpush.bf16.msra.mxu0 %v371
    %483 = vmatpush.bf16.msra.mxu0 %v370
    %484 = vmatpush.bf16.msra.mxu0 %v369
    %485 = vmatpush.bf16.msra.mxu0 %v368
    %486 = vmatpush.bf16.msra.mxu0 %v367
    %487 = vmatpush.bf16.msra.mxu0 %v366
    %488 = vmatmul.bf16.gmra.mxu0 %v47
    %v489 = vpop.f32.mrf.mxu0
    %v490 = vadd.f32 %v476, %v489
    %v491 = vpop.f32.mrf.mxu0
    %v492 = vadd.f32 %v478, %v491
    %493 = vdwg.mxu0
    %494 = vmatpush.bf16.msra.mxu0 %v381
    %495 = vmatpush.bf16.msra.mxu0 %v380
    %496 = vmatpush.bf16.msra.mxu0 %v379
    %497 = vmatpush.bf16.msra.mxu0 %v378
    %498 = vmatpush.bf16.msra.mxu0 %v377
    %499 = vmatpush.bf16.msra.mxu0 %v376
    %500 = vmatpush.bf16.msra.mxu0 %v375
    %501 = vmatpush.bf16.msra.mxu0 %v374
    %502 = vmatmul.bf16.gmra.mxu0 %v48
    %v503 = vpop.f32.mrf.mxu0
    %v504 = vadd.f32 %v490, %v503
    %v505 = vpop.f32.mrf.mxu0
    %v506 = vadd.f32 %v492, %v505
    %507 = vdwg.mxu0
    %508 = vmatpush.bf16.msra.mxu0 %v389
    %509 = vmatpush.bf16.msra.mxu0 %v388
    %510 = vmatpush.bf16.msra.mxu0 %v387
    %511 = vmatpush.bf16.msra.mxu0 %v386
    %512 = vmatpush.bf16.msra.mxu0 %v385
    %513 = vmatpush.bf16.msra.mxu0 %v384
    %514 = vmatpush.bf16.msra.mxu0 %v383
    %515 = vmatpush.bf16.msra.mxu0 %v382
    %516 = vmatmul.bf16.gmra.mxu0 %v49
    %v517 = vpop.f32.mrf.mxu0
    %v518 = vadd.f32 %v504, %v517
    %v519 = vpop.f32.mrf.mxu0
    %v520 = vadd.f32 %v506, %v519
    %521 = vdwg.mxu0
    %522 = vmatpush.bf16.msra.mxu0 %v397
    %523 = vmatpush.bf16.msra.mxu0 %v396
    %524 = vmatpush.bf16.msra.mxu0 %v395
    %525 = vmatpush.bf16.msra.mxu0 %v394
    %526 = vmatpush.bf16.msra.mxu0 %v393
    %527 = vmatpush.bf16.msra.mxu0 %v392
    %528 = vmatpush.bf16.msra.mxu0 %v391
    %529 = vmatpush.bf16.msra.mxu0 %v390
    %530 = vmatmul.bf16.gmra.mxu0 %v50
    %v531 = vpop.f32.mrf.mxu0
    %v532 = vadd.f32 %v518, %v531
    %v533 = vpop.f32.mrf.mxu0
    %v534 = vadd.f32 %v520, %v533
    %535 = vdwg.mxu0
    %536 = vmatpush.bf16.msra.mxu0 0
    %537 = vmatpush.bf16.msra.mxu0 0
    %538 = vmatpush.bf16.msra.mxu0 0
    %539 = vmatpush.bf16.msra.mxu0 0
    %540 = vmatpush.bf16.msra.mxu0 0
    %541 = vmatpush.bf16.msra.mxu0 0
    %542 = vmatpush.bf16.msra.mxu0 0
    %543 = vmatpush.bf16.msra.mxu0 %v398
    %544 = vmatmul.bf16.gmra.mxu0 %v450
    %v545 = vpop.f32.mrf.mxu0
    %v546 = vadd.f32 %v532, %v545
    %v547 = vpop.f32.mrf.mxu0
    %v548 = vadd.f32 %v534, %v547
    %549 = vdwg.mxu0
    %550 = vst [vmem:[%s3] sm:$0xff] %v546
    %551 = vst [vmem:[%s3 + $0x8] sm:$0xff] %v548
    // Predicated region
    $region18: #{mnist_net_forward.1} parent=1 // pred_check
      _
    $region19: #{mnist_net_forward.1} parent=1 // pred_check_branch
      %553 = sbr.rel (0) target = $region21
    $region20: #{mnist_net_forward.1} parent=1 // pred_region
      _
    $region21: #{mnist_net_forward.1} parent=1 // pred_fallthru
      _
    // Predicated region
    $region22: #{mnist_net_forward.1} parent=1 // pred_check
      _
    $region23: #{mnist_net_forward.1} parent=1 // pred_check_branch
      %555 = sbr.rel (0) target = $region25
    $region24: #{mnist_net_forward.1} parent=1 // pred_region
      _
    $region25: #{mnist_net_forward.1} parent=1 // pred_fallthru
      _
    %556 = vsyncpa [#allocation3], 1

</llo_original>
